<compile_context>
chip_gen: v5e
topology: v5e:2x2
jax: 0.10.0
libtpu: 0.0.40
codegen_flags: <defaults>
</compile_context>

<pallas_src>
import jax
import jax.numpy as jnp
from jax.experimental import pallas as pl
from jax.experimental.pallas import tpu as pltpu


def _passthrough_kernel(embs_ref, mask_ref, out_ref):
    # Single VPU elementwise multiply on lane-dense 2D slabs.
    out_ref[...] = embs_ref[...] * mask_ref[...]


def debug_masked_passthrough(embs, mask):
    """Debug-only Pallas pass-through (out = embs * mask[..., None]).

    Not used by NullPhraseLayer.forward(); exists only to exercise a real
    pallas_call with the optimized (ungridded, lane-dense) layout.
    """
    B, S, D = embs.shape
    # Lane-dense layout: last dim = S*D (256 for the example shapes, a multiple
    # of 128) -> unmasked stores.  Mask is expanded/cast in the wrapper so the
    # kernel does no broadcasting work.
    embs2d = embs.reshape(B, S * D)
    mask2d = (
        jnp.broadcast_to(mask[:, :, None].astype(embs.dtype), (B, S, D))
        .reshape(B, S * D)
    )
    out2d = pl.pallas_call(
        _passthrough_kernel,
        out_shape=jax.ShapeDtypeStruct((B, S * D), embs.dtype),
        in_specs=[
            pl.BlockSpec(memory_space=pltpu.MemorySpace.VMEM),
            pl.BlockSpec(memory_space=pltpu.MemorySpace.VMEM),
        ],
        out_specs=pl.BlockSpec(memory_space=pltpu.MemorySpace.VMEM),
    )(embs2d, mask2d)
    return out2d.reshape(B, S, D)


class NullPhraseLayer:
    """Dummy phrase layer that does nothing. Exists solely for API compatibility."""

    def __init__(self, input_dim: int):
        self.input_dim = input_dim

    def get_input_dim(self):
        return self.input_dim

    def get_output_dim(self):
        return 0

    def forward(self, embs, mask):
        # Exact PyTorch semantics: the module performs no computation and
        # returns None.  Per the perf review, no kernel is launched here —
        # any pallas_call would be dead work since the result is discarded.
        # TODO(synk): there is no hot-path compute to port (output_dim == 0);
        # debug_masked_passthrough() above is the optional Pallas plumbing.
        return None


if __name__ == "__main__":
    key = jax.random.PRNGKey(0)
    batch, seq, hidden = 2, 8, 32

    k_e, k_m = jax.random.split(key)
    embs = jax.random.normal(k_e, (batch, seq, hidden), dtype=jnp.float32)
    mask = (jax.random.uniform(k_m, (batch, seq)) > 0.2).astype(jnp.float32)

    layer = NullPhraseLayer(input_dim=hidden)
    out = layer.forward(embs, mask)
    assert out is None
    assert layer.get_input_dim() == hidden
    assert layer.get_output_dim() == 0

    # Exercise the (debug-only) Pallas kernel once and validate it.
    dbg = debug_masked_passthrough(embs, mask)
    dbg = jax.block_until_ready(dbg)
    ref = embs * mask[:, :, None]
    assert jnp.allclose(dbg, ref, atol=1e-6), "debug pass-through mismatch"

    print("KERNEL_OK")
</pallas_src>

<mosaic_0001>
module attributes {stable_mosaic.version = 11 : i64} {
  func.func @_passthrough_kernel(%arg0: memref<2x256xf32, #tpu.memory_space<vmem>>, %arg1: memref<2x256xf32, #tpu.memory_space<vmem>>, %arg2: memref<2x256xf32, #tpu.memory_space<vmem>>) attributes {dimension_semantics = [], scalar_prefetch = 0 : i64, scratch_operands = 0 : i64, tpu.core_type = #tpu.core_type<tc>} {
    %c0 = arith.constant 0 : index
    %c0_0 = arith.constant 0 : index
    %0 = vector.load %arg0[%c0, %c0_0] : memref<2x256xf32, #tpu.memory_space<vmem>>, vector<2x256xf32>
    %c0_1 = arith.constant 0 : index
    %c0_2 = arith.constant 0 : index
    %1 = vector.load %arg1[%c0_1, %c0_2] : memref<2x256xf32, #tpu.memory_space<vmem>>, vector<2x256xf32>
    %2 = arith.mulf %0, %1 : vector<2x256xf32>
    %c0_3 = arith.constant 0 : index
    %c0_4 = arith.constant 0 : index
    %3 = vector.load %arg2[%c0_3, %c0_4] : memref<2x256xf32, #tpu.memory_space<vmem>>, vector<2x256xf32>
    tpu.vector_store %arg2[%c0_3, %c0_4], %2 {strides = array<i32>} : memref<2x256xf32, #tpu.memory_space<vmem>>, vector<2x256xf32>,
    return
  }
}

</mosaic_0001>

<llo_original>
// kernel: tpu_custom_call.1
$region0: #{tpu_custom_call.1}
  #allocation0 [shape = 'u32[]', space=smem, size = 0x4, offset = 0x4, fixed_abs, tag = 'smem constant byte address 0x4 - core index']
  #allocation1 [shape = 'u32[72,128]{1,0:T(1,128)}', space=vmem, size = 0x9000, scoped, tag = 'internal scratch']
  %s0 = inlined_call_operand.hbm [shape: f32[2,256], index: 0, kind: input, shape index: {}]
  %s1 = inlined_call_operand.hbm [shape: f32[2,256], index: 1, kind: input, shape index: {}]
  %s2 = inlined_call_operand.hbm [shape: f32[2,256], index: 2, kind: output, shape index: {}]
  %s3 = sld [smem:[#allocation0]]
  $region26: #{tpu_custom_call.1} parent=0
    _
  %s5 = ssub.s32 1, %s3
  %s6 = scalar_select 0, %s5, %s3
  $region1: #{tpu_custom_call.1} parent=0
    #allocation2 [shape = 'u8[2048]{0}', space=vmem, size = 0x800, scoped, tag = 'input window, operand 0, single buffered']
    #allocation3 [shape = 's32[1]{0}', space=sflag, size = 0x4, scoped, tag = 'scoped memory for tpu_custom_call.1']
    #allocation4 [shape = 's32[1]{0}', space=sflag, size = 0x4, scoped, tag = 'scoped memory for tpu_custom_call.1']
    #allocation5 [shape = 'u8[2048]{0}', space=vmem, size = 0x800, scoped, tag = 'input window, operand 1, single buffered']
    #allocation6 [shape = 's32[1]{0}', space=sflag, size = 0x4, scoped, tag = 'scoped memory for tpu_custom_call.1']
    #allocation7 [shape = 'u8[2048]{0}', space=vmem, size = 0x800, scoped, tag = 'output window, operand 0, single buffered']
    %7 = vsyncpa [#allocation3], 0
    %8 = vsyncpa [#allocation6], 0
    %9 = vsyncpa [#allocation4], 0
    // Predicated region
    $region2: #{tpu_custom_call.1} parent=1 // pred_check
      _
    $region3: #{tpu_custom_call.1} parent=1 // pred_check_branch
      %11 = sbr.rel (0) target = $region5
    $region4: #{tpu_custom_call.1} parent=1 // pred_region
      %13 = vsyncadd [#allocation3], 0
      %s15 = sshll.u32 %s0, 4
      %s16 = int_to_ptr.hbm [resolvable:$true] %s15
      %s17 = sshll.u32 [#allocation2], 4
      %s18 = int_to_ptr.vmem [resolvable:$true] %s17
      %20 = dma.hbm_to_vmem [thread:$0]  %s16, 64, %s18, [#allocation3]
    $region5: #{tpu_custom_call.1} parent=1 // pred_fallthru
      _
    // Predicated region
    $region6: #{tpu_custom_call.1} parent=1 // pred_check
      _
    $region7: #{tpu_custom_call.1} parent=1 // pred_check_branch
      %22 = sbr.rel (0) target = $region9
    $region8: #{tpu_custom_call.1} parent=1 // pred_region
      %24 = vsyncadd [#allocation6], 0
      %s26 = sshll.u32 %s1, 4
      %s27 = int_to_ptr.hbm [resolvable:$true] %s26
      %s28 = sshll.u32 [#allocation5], 4
      %s29 = int_to_ptr.vmem [resolvable:$true] %s28
      %31 = dma.hbm_to_vmem [thread:$0]  %s27, 64, %s29, [#allocation6]
    $region9: #{tpu_custom_call.1} parent=1 // pred_fallthru
      _
    // Predicated region
    $region10: #{tpu_custom_call.1} parent=1 // pred_check
      _
    $region11: #{tpu_custom_call.1} parent=1 // pred_check_branch
      %33 = sbr.rel (0) target = $region13
    $region12: #{tpu_custom_call.1} parent=1 // pred_region
      %35 = dma.done [#allocation3], 64
    $region13: #{tpu_custom_call.1} parent=1 // pred_fallthru
      _
    // Predicated region
    $region14: #{tpu_custom_call.1} parent=1 // pred_check
      _
    $region15: #{tpu_custom_call.1} parent=1 // pred_check_branch
      %37 = sbr.rel (0) target = $region17
    $region16: #{tpu_custom_call.1} parent=1 // pred_region
      %39 = dma.done [#allocation6], 64
    $region17: #{tpu_custom_call.1} parent=1 // pred_fallthru
      _
    %v40 = vld [vmem:[#allocation2] sm:$0xf]
    %v41 = vld [vmem:[#allocation5] sm:$0xf]
    %v42 = vmul.f32 %v40, %v41
    %43 = vst [vmem:[#allocation7] sm:$0xf] %v42
    // Predicated region
    $region18: #{tpu_custom_call.1} parent=1 // pred_check
      _
    $region19: #{tpu_custom_call.1} parent=1 // pred_check_branch
      %45 = sbr.rel (0) target = $region21
    $region20: #{tpu_custom_call.1} parent=1 // pred_region
      %47 = vsyncadd [#allocation4], 0
      %s49 = sshll.u32 [#allocation7], 4
      %s50 = int_to_ptr.vmem [resolvable:$true] %s49
      %s51 = sshll.u32 %s2, 4
      %s52 = int_to_ptr.hbm [resolvable:$true] %s51
      %54 = dma.vmem_to_hbm [thread:$0]  %s50, 64, %s52, [#allocation4]
    $region21: #{tpu_custom_call.1} parent=1 // pred_fallthru
      _
    // Predicated region
    $region22: #{tpu_custom_call.1} parent=1 // pred_check
      _
    $region23: #{tpu_custom_call.1} parent=1 // pred_check_branch
      %56 = sbr.rel (0) target = $region25
    $region24: #{tpu_custom_call.1} parent=1 // pred_region
      %58 = dma.done [#allocation4], 64
    $region25: #{tpu_custom_call.1} parent=1 // pred_fallthru
      _
    %59 = vsyncpa [#allocation3], 1
    %60 = vsyncpa [#allocation6], 1
    %61 = vsyncpa [#allocation4], 1

</llo_original>
